<compile_context>
chip_gen: v7x
topology: tpu7x:2x2x1
jax: 0.10.0
libtpu: 0.0.40
codegen_flags: <defaults>
</compile_context>

<pallas_src>
import math

import jax
import jax.numpy as jnp
from jax.experimental import pallas as pl
from jax.experimental.pallas import tpu as pltpu


_MAX_TILE_ROWS = 512  # output rows per grid step; fits comfortably in the
                      # default 32 MiB scoped VMEM even on v7x (64 MiB phys).


def _row_tile(n: int, cap: int = _MAX_TILE_ROWS) -> int:
    return n if n <= cap else cap


# --------------------------------------------------------------------------
# Kernels
# --------------------------------------------------------------------------

def _timestep_kernel(x_ref, w_ref, b_ref, pe_ref, o_ref):
    """One (batch, timestep-tile) grid step.

    x_ref : (F, T_tile)   slice of x in its ORIGINAL layout (no transpose)
    w_ref : (F, M)        resident weight (torch weight transposed)
    b_ref : (1, M)        resident bias
    pe_ref: (T_tile, M)   precomputed positional-encoding rows
    o_ref : (T_tile, M)
    """
    # y[t, m] = sum_f x[f, t] * w[f, m]  -> contract dim 0 of both (TN matmul).
    y = jax.lax.dot_general(
        x_ref[...], w_ref[...],
        dimension_numbers=(((0,), (0,)), ((), ())),
        preferred_element_type=jnp.float32,
    )
    o_ref[...] = (y + b_ref[...] + pe_ref[...]).astype(o_ref.dtype)


def _feature_kernel(x_ref, w_ref, b_ref, o_ref):
    """Row-tiled linear.

    x_ref : (R_tile, T)   rows = flattened (batch, feature)
    w_ref : (T, M)        resident weight
    b_ref : (1, M)        resident bias
    o_ref : (R_tile, M)
    """
    y = jnp.dot(x_ref[...], w_ref[...], preferred_element_type=jnp.float32)
    o_ref[...] = (y + b_ref[...]).astype(o_ref.dtype)


# --------------------------------------------------------------------------
# pallas_call wrappers
# --------------------------------------------------------------------------

def embedding_timestep(x, w, b, pe):
    """x: (B, F, T); w: (F, M); b: (1, M); pe: (T, M) -> (B, T, M)."""
    B, F, T = x.shape
    M = w.shape[1]
    tile_t = _row_tile(T)                      # == T if small, else 512 (128-aligned)
    grid = (B, pl.cdiv(T, tile_t))
    return pl.pallas_call(
        _timestep_kernel,
        out_shape=jax.ShapeDtypeStruct((B, T, M), jnp.float32),
        grid_spec=pltpu.PrefetchScalarGridSpec(
            num_scalar_prefetch=0,
            grid=grid,
            in_specs=[
                # x in original layout; leading batch dim squeezed out.
                pl.BlockSpec((None, F, tile_t), lambda bi, ti: (bi, 0, ti)),
                pl.BlockSpec((F, M), lambda bi, ti: (0, 0)),       # resident W
                pl.BlockSpec((1, M), lambda bi, ti: (0, 0)),       # resident bias
                pl.BlockSpec((tile_t, M), lambda bi, ti: (ti, 0)),  # PE rows
            ],
            out_specs=pl.BlockSpec((None, tile_t, M), lambda bi, ti: (bi, ti, 0)),
        ),
        compiler_params=pltpu.CompilerParams(
            dimension_semantics=("parallel", "parallel")),
    )(x, w, b, pe)


def embedding_feature(x, w, b):
    """x: (B, F, T); w: (T, M); b: (1, M) -> (B, F, M)."""
    B, F, T = x.shape
    M = w.shape[1]
    N = B * F
    x2 = x.reshape(N, T)                       # free reshape (no transpose)
    tile_r = _row_tile(N)
    grid = (pl.cdiv(N, tile_r),)
    out = pl.pallas_call(
        _feature_kernel,
        out_shape=jax.ShapeDtypeStruct((N, M), jnp.float32),
        grid_spec=pltpu.PrefetchScalarGridSpec(
            num_scalar_prefetch=0,
            grid=grid,
            in_specs=[
                pl.BlockSpec((tile_r, T), lambda ri: (ri, 0)),
                pl.BlockSpec((T, M), lambda ri: (0, 0)),           # resident W
                pl.BlockSpec((1, M), lambda ri: (0, 0)),           # resident bias
            ],
            out_specs=pl.BlockSpec((tile_r, M), lambda ri: (ri, 0)),
        ),
        compiler_params=pltpu.CompilerParams(
            dimension_semantics=("parallel",)),
    )(x2, w, b)
    return out.reshape(B, F, M)


# --------------------------------------------------------------------------
# Module
# --------------------------------------------------------------------------

def make_positional_encoding(T: int, M: int):
    """Matches torch position_encode (assumes even d_model, as the torch code does)."""
    pos = jnp.arange(T, dtype=jnp.float32)[:, None]                       # (T, 1)
    inv = jnp.exp(jnp.arange(0, M, 2, dtype=jnp.float32)
                  * (-math.log(10000.0) / M))[None, :]                    # (1, M/2)
    ang = pos @ inv                                                        # (T, M/2)
    pe = jnp.ones((T, M), jnp.float32)
    pe = pe.at[:, 0::2].set(jnp.sin(ang))
    pe = pe.at[:, 1::2].set(jnp.cos(ang))
    return pe


class EmbeddingPallas:
    """JAX/Pallas port of the torch Embedding module (forward only)."""

    def __init__(self, d_feature: int, d_timestep: int, d_model: int,
                 wise: str = "timestep", key=None):
        assert wise in ("timestep", "feature"), "Embedding wise error!"
        self.wise = wise
        self.d_model = d_model
        in_dim = d_feature if wise == "timestep" else d_timestep
        if key is None:
            key = jax.random.PRNGKey(0)
        kw, kb = jax.random.split(key)
        # Mirrors torch.nn.Linear's uniform(-1/sqrt(in), 1/sqrt(in)) init.
        bound = 1.0 / math.sqrt(in_dim)
        # Weight stored pre-transposed: (in_dim, d_model).
        self.weight = jax.random.uniform(kw, (in_dim, d_model), jnp.float32,
                                         -bound, bound)
        self.bias = jax.random.uniform(kb, (1, d_model), jnp.float32,
                                       -bound, bound)
        # PE depends only on (d_timestep, d_model): precompute once.
        self.pe = (make_positional_encoding(d_timestep, d_model)
                   if wise == "timestep" else None)

    def __call__(self, x):
        # x: (B, d_feature, d_timestep), float32
        if self.wise == "timestep":
            y = embedding_timestep(x, self.weight, self.bias, self.pe)
        else:  # 'feature'
            y = embedding_feature(x, self.weight, self.bias)
        return y, None


# --------------------------------------------------------------------------
# Pure-JAX reference + self-test
# --------------------------------------------------------------------------

def _reference(x, module):
    if module.wise == "timestep":
        xr = jnp.swapaxes(x, -1, -2)
        y = xr @ module.weight + module.bias
        T, M = y.shape[-2], y.shape[-1]
        pos = jnp.arange(T, dtype=jnp.float32)[:, None]
        temp = jnp.exp(jnp.arange(0, M, 2, dtype=jnp.float32)
                       * (-math.log(10000.0) / M))[None, :]
        ang = pos @ temp
        pe = jnp.ones((T, M), jnp.float32)
        pe = pe.at[:, 0::2].set(jnp.sin(ang))
        pe = pe.at[:, 1::2].set(jnp.cos(ang))
        return y + pe
    else:
        return x @ module.weight + module.bias


if __name__ == "__main__":
    key = jax.random.PRNGKey(0)
    kx, kp1, kp2 = jax.random.split(key, 3)

    B, d_feature, d_timestep, d_model = 2, 4, 16, 32
    x = jax.random.normal(kx, (B, d_feature, d_timestep), jnp.float32)

    # timestep-wise (default branch, includes positional encoding)
    emb_t = EmbeddingPallas(d_feature, d_timestep, d_model, wise="timestep", key=kp1)
    y_t, _ = emb_t(x)
    y_t = jax.block_until_ready(y_t)
    assert y_t.shape == (B, d_timestep, d_model)
    ref_t = _reference(x, emb_t)
    assert jnp.allclose(y_t, ref_t, atol=1e-4, rtol=1e-4), "timestep-wise mismatch"

    # feature-wise (plain linear over the timestep axis)
    emb_f = EmbeddingPallas(d_feature, d_timestep, d_model, wise="feature", key=kp2)
    y_f, _ = emb_f(x)
    y_f = jax.block_until_ready(y_f)
    assert y_f.shape == (B, d_feature, d_model)
    ref_f = _reference(x, emb_f)
    assert jnp.allclose(y_f, ref_f, atol=1e-4, rtol=1e-4), "feature-wise mismatch"

    print("KERNEL_OK")
</pallas_src>

<mosaic_0001>
module attributes {stable_mosaic.version = 11 : i64} {
  func.func @_timestep_kernel(%arg0: i32, %arg1: i32, %arg2: memref<1x4x16xf32, #tpu.memory_space<vmem>>, %arg3: memref<4x32xf32, #tpu.memory_space<vmem>>, %arg4: memref<1x32xf32, #tpu.memory_space<vmem>>, %arg5: memref<16x32xf32, #tpu.memory_space<vmem>>, %arg6: memref<1x16x32xf32, #tpu.memory_space<vmem>>) attributes {dimension_semantics = [#tpu.dimension_semantics<parallel>, #tpu.dimension_semantics<parallel>], iteration_bounds = array<i64: 2, 1>, scalar_prefetch = 0 : i64, scratch_operands = 0 : i64, tpu.core_type = #tpu.core_type<tc>, window_params = [{transform_indices = @transform_0, window_bounds = array<i64: 1, 4, 16>}, {pipeline_mode = #tpu.pipeline_mode<synchronous>, transform_indices = @transform_1, window_bounds = array<i64: 4, 32>}, {pipeline_mode = #tpu.pipeline_mode<synchronous>, transform_indices = @transform_2, window_bounds = array<i64: 1, 32>}, {transform_indices = @transform_3, window_bounds = array<i64: 16, 32>}, {transform_indices = @transform_4, window_bounds = array<i64: 1, 16, 32>}]} {
    %c0 = arith.constant 0 : index
    %c0_0 = arith.constant 0 : index
    %c0_1 = arith.constant 0 : index
    %0 = vector.load %arg2[%c0, %c0_0, %c0_1] : memref<1x4x16xf32, #tpu.memory_space<vmem>>, vector<1x4x16xf32>
    %1 = vector.shape_cast %0 : vector<1x4x16xf32> to vector<4x16xf32>
    %c0_2 = arith.constant 0 : index
    %c0_3 = arith.constant 0 : index
    %2 = vector.load %arg3[%c0_2, %c0_3] : memref<4x32xf32, #tpu.memory_space<vmem>>, vector<4x32xf32>
    %cst = arith.constant dense<0.000000e+00> : vector<16x32xf32>
    %3 = tpu.matmul %1, %2, %cst {dimension_numbers = #tpu.dot_dimension_numbers<[0], [0], [1], [1], [0, 1, 1, 1], [], []>} : vector<4x16xf32>, vector<4x32xf32>, vector<16x32xf32> -> vector<16x32xf32>
    %c0_4 = arith.constant 0 : index
    %c0_5 = arith.constant 0 : index
    %4 = vector.load %arg4[%c0_4, %c0_5] : memref<1x32xf32, #tpu.memory_space<vmem>>, vector<1x32xf32>
    %5 = vector.broadcast %4 : vector<1x32xf32> to vector<16x32xf32>
    %6 = arith.addf %3, %5 : vector<16x32xf32>
    %c0_6 = arith.constant 0 : index
    %c0_7 = arith.constant 0 : index
    %7 = vector.load %arg5[%c0_6, %c0_7] : memref<16x32xf32, #tpu.memory_space<vmem>>, vector<16x32xf32>
    %8 = arith.addf %6, %7 : vector<16x32xf32>
    %c0_8 = arith.constant 0 : index
    %c0_9 = arith.constant 0 : index
    %c0_10 = arith.constant 0 : index
    %9 = vector.load %arg6[%c0_8, %c0_9, %c0_10] : memref<1x16x32xf32, #tpu.memory_space<vmem>>, vector<1x16x32xf32>
    %10 = vector.shape_cast %9 : vector<1x16x32xf32> to vector<16x32xf32>
    %11 = vector.shape_cast %8 : vector<16x32xf32> to vector<1x16x32xf32>
    tpu.vector_store %arg6[%c0_8, %c0_9, %c0_10], %11 {strides = array<i32>} : memref<1x16x32xf32, #tpu.memory_space<vmem>>, vector<1x16x32xf32>,
    return
  }
  func.func @transform_0(%arg0: i32, %arg1: i32) -> (i32, i32, i32) {
    %c0_i32 = arith.constant 0 : i32
    %c0_i32_0 = arith.constant 0 : i32
    return %arg0, %c0_i32, %arg1 : i32, i32, i32
  }
  func.func @transform_1(%arg0: i32, %arg1: i32) -> (i32, i32) {
    %c0_i32 = arith.constant 0 : i32
    %c0_i32_0 = arith.constant 0 : i32
    %c0_i32_1 = arith.constant 0 : i32
    return %c0_i32, %c0_i32_0 : i32, i32
  }
  func.func @transform_2(%arg0: i32, %arg1: i32) -> (i32, i32) {
    %c0_i32 = arith.constant 0 : i32
    %c0_i32_0 = arith.constant 0 : i32
    %c0_i32_1 = arith.constant 0 : i32
    return %c0_i32, %c0_i32_0 : i32, i32
  }
  func.func @transform_3(%arg0: i32, %arg1: i32) -> (i32, i32) {
    %c0_i32 = arith.constant 0 : i32
    %c0_i32_0 = arith.constant 0 : i32
    return %arg1, %c0_i32 : i32, i32
  }
  func.func @transform_4(%arg0: i32, %arg1: i32) -> (i32, i32, i32) {
    %c0_i32 = arith.constant 0 : i32
    %c0_i32_0 = arith.constant 0 : i32
    return %arg0, %arg1, %c0_i32 : i32, i32, i32
  }
}

</mosaic_0001>

<llo_original>
// kernel: tpu_custom_call.1
$region0: #{tpu_custom_call.1}
  #allocation0 [shape = 'u32[]', space=smem, size = 0x4, offset = 0x4, fixed_abs, tag = 'smem constant byte address 0x4 - core index']
  #allocation1 [shape = 'u32[144,128]{1,0:T(1,128)}', space=vmem, size = 0x12000, scoped, tag = 'internal scratch']
  %s0 = inlined_call_operand.hbm [shape: f32[2,4,16], index: 0, kind: input, shape index: {}]
  %s1 = inlined_call_operand.hbm [shape: f32[4,32], index: 1, kind: input, shape index: {}]
  %s2 = inlined_call_operand.vmem [shape: f32[1,32], index: 2, kind: input, shape index: {}]
  %s3 = inlined_call_operand.hbm [shape: f32[16,32], index: 3, kind: input, shape index: {}]
  %s4 = inlined_call_operand.hbm [shape: f32[2,16,32], index: 4, kind: output, shape index: {}]
  %s5 = sld [smem:[#allocation0]]
  $region61: #{tpu_custom_call.1} parent=0
    _
  %s7 = ssub.s32 1, %s5
  %s8 = scalar_select 0, %s7, %s5
  $region1: #{tpu_custom_call.1} parent=0
    #allocation2 [shape = 'u8[4096]{0}', space=vmem, size = 0x1000, scoped, tag = 'input window, operand 0']
    #allocation3 [shape = 's32[2]{0}', space=sflag, size = 0x8, scoped, tag = 'scoped memory for tpu_custom_call.1']
    #allocation4 [shape = 's32[2]{0}', space=sflag, size = 0x8, scoped, tag = 'scoped memory for tpu_custom_call.1']
    #allocation5 [shape = 'u8[2048]{0}', space=vmem, size = 0x800, scoped, tag = 'input window, operand 1, single buffered']
    #allocation6 [shape = 's32[1]{0}', space=sflag, size = 0x4, scoped, tag = 'scoped memory for tpu_custom_call.1']
    #allocation7 [shape = 'u8[8192]{0}', space=vmem, size = 0x2000, scoped, tag = 'input window, operand 3, single buffered']
    #allocation8 [shape = 'u8[16384]{0}', space=vmem, size = 0x4000, scoped, tag = 'output window, operand 0']
    %9 = vsyncpa [#allocation3], 0
    %s10 = scalar_lea.sflag [#allocation3], 1
    %11 = vsyncpa %s10, 0
    %12 = vsyncpa [#allocation6], 0
    %13 = vsyncpa [#allocation4], 0
    %s14 = scalar_lea.sflag [#allocation4], 1
    %15 = vsyncpa %s14, 0
    loop: start=0, step=1, limit=4
    $region2: #{tpu_custom_call.1} parent=1 // loop_pre_header
      _
    $region3: #{tpu_custom_call.1} parent=1 // loop_header
      %s17 = sphi 0, %s21
      %p18 = scmp.ge.s32.totalorder %s17, 4
      %s24 = sphi 0, %s36
      %s25 = sphi 0, %s32
      %s26 = sphi 0, %s24
      %s27 = sphi 0, %s25
      %s28 = sphi 0, %s26
      %s29 = sphi 0, %s27
      %s41 = sphi 0, %s43
      %s44 = sphi 0, %s41
      %s45 = sphi 0, %s44
      %s61 = sphi 0, %s45
      %s65 = sphi 0, %s65
      %s67 = sphi 0, %s65
      %s68 = sphi 0, %s67
      %s82 = sphi 0, %s68
      %s86 = sphi 0, %s86
      %s88 = sphi 0, %s86
      %s89 = sphi 0, %s88
      %s103 = sphi 0, %s89
      %s109 = sphi 0, %s111
      %s112 = sphi 0, %s109
      %s113 = sphi 0, %s112
      %s129 = sphi 0, %s113
      %s137 = sphi 0, %s139
      %s140 = sphi 0, %s137
      %s141 = sphi 0, %s140
      %s157 = sphi 0, %s141
    $region4: #{tpu_custom_call.1} parent=1 // loop_header_branch
      %20 = sbr.rel (%p18) target = $region8
    $region5: #{tpu_custom_call.1} parent=1 // loop_body
      %s22 = ssub.s32 %s17, 1
      %s23 = ssub.s32 %s17, 2
      %s30 = sadd.s32 1, %s25
      %p31 = scmp.ge.s32.totalorder %s30, 1
      %s32 = scalar_select %p31, 0, %s30
      %s33 = sadd.s32 1, %s24
      %s34 = scalar_select %p31, %s33, %s24
      %p35 = scmp.ge.s32.totalorder %s34, 2
      %s36 = scalar_select %p35, 0, %s34
      %s37 = ssub.s32 %s24, %s36
      %s38 = ssub.s32 %s25, %s32
      %s39 = sor.u32 %s37, %s38
      %p40 = scmp.eq.s32.totalorder %s39, 0
      %s42 = sadd.s32 %s41, 1
      %s43 = scalar_select %p40, %s41, %s42
      %p46 = pneg %p40
      %p47 = scmp.eq.s32.totalorder %s17, 1
      %p48 = por %p46, %p47
      %p49 = scmp.ne.s32.totalorder %s41, %s44
      %p50 = scmp.eq.s32.totalorder %s17, 0
      %p51 = por %p49, %p50
      %p52 = scmp.ne.s32.totalorder %s41, %s44
      %p53 = scmp.eq.s32.totalorder %s22, 1
      %p54 = por %p52, %p53
      %p55 = scmp.ne.s32.totalorder %s44, %s45
      %p56 = scmp.eq.s32.totalorder %s22, 0
      %p57 = por %p55, %p56
      %p58 = scmp.ne.s32.totalorder %s44, %s45
      %p59 = scmp.eq.s32.totalorder %s23, 1
      %p60 = por %p58, %p59
      %p62 = scmp.ne.s32.totalorder %s45, %s61
      %p63 = scmp.eq.s32.totalorder %s23, 0
      %p64 = por %p62, %p63
      %s66 = sadd.s32 %s65, 1
      %p69 = scmp.eq.s32.totalorder %s17, 1
      %p70 = scmp.ne.s32.totalorder %s65, %s67
      %p71 = scmp.eq.s32.totalorder %s17, 0
      %p72 = por %p70, %p71
      %p73 = scmp.ne.s32.totalorder %s65, %s67
      %p74 = scmp.eq.s32.totalorder %s22, 1
      %p75 = por %p73, %p74
      %p76 = scmp.ne.s32.totalorder %s67, %s68
      %p77 = scmp.eq.s32.totalorder %s22, 0
      %p78 = por %p76, %p77
      %p79 = scmp.ne.s32.totalorder %s67, %s68
      %p80 = scmp.eq.s32.totalorder %s23, 1
      %p81 = por %p79, %p80
      %p83 = scmp.ne.s32.totalorder %s68, %s82
      %p84 = scmp.eq.s32.totalorder %s23, 0
      %p85 = por %p83, %p84
      %s87 = sadd.s32 %s86, 1
      %p90 = scmp.eq.s32.totalorder %s17, 1
      %p91 = scmp.ne.s32.totalorder %s86, %s88
      %p92 = scmp.eq.s32.totalorder %s17, 0
      %p93 = por %p91, %p92
      %p94 = scmp.ne.s32.totalorder %s86, %s88
      %p95 = scmp.eq.s32.totalorder %s22, 1
      %p96 = por %p94, %p95
      %p97 = scmp.ne.s32.totalorder %s88, %s89
      %p98 = scmp.eq.s32.totalorder %s22, 0
      %p99 = por %p97, %p98
      %p100 = scmp.ne.s32.totalorder %s88, %s89
      %p101 = scmp.eq.s32.totalorder %s23, 1
      %p102 = por %p100, %p101
      %p104 = scmp.ne.s32.totalorder %s89, %s103
      %p105 = scmp.eq.s32.totalorder %s23, 0
      %p106 = por %p104, %p105
      %s107 = ssub.s32 %s25, %s32
      %p108 = scmp.eq.s32.totalorder %s107, 0
      %s110 = sadd.s32 %s109, 1
      %s111 = scalar_select %p108, %s109, %s110
      %p114 = pneg %p108
      %p115 = scmp.eq.s32.totalorder %s17, 1
      %p116 = por %p114, %p115
      %p117 = scmp.ne.s32.totalorder %s109, %s112
      %p118 = scmp.eq.s32.totalorder %s17, 0
      %p119 = por %p117, %p118
      %p120 = scmp.ne.s32.totalorder %s109, %s112
      %p121 = scmp.eq.s32.totalorder %s22, 1
      %p122 = por %p120, %p121
      %p123 = scmp.ne.s32.totalorder %s112, %s113
      %p124 = scmp.eq.s32.totalorder %s22, 0
      %p125 = por %p123, %p124
      %p126 = scmp.ne.s32.totalorder %s112, %s113
      %p127 = scmp.eq.s32.totalorder %s23, 1
      %p128 = por %p126, %p127
      %p130 = scmp.ne.s32.totalorder %s113, %s129
      %p131 = scmp.eq.s32.totalorder %s23, 0
      %p132 = por %p130, %p131
      %s133 = ssub.s32 %s24, %s36
      %s134 = ssub.s32 %s25, %s32
      %s135 = sor.u32 %s133, %s134
      %p136 = scmp.eq.s32.totalorder %s135, 0
      %s138 = sadd.s32 %s137, 1
      %s139 = scalar_select %p136, %s137, %s138
      %p142 = pneg %p136
      %p143 = scmp.eq.s32.totalorder %s17, 1
      %p144 = por %p142, %p143
      %p145 = scmp.ne.s32.totalorder %s137, %s140
      %p146 = scmp.eq.s32.totalorder %s17, 0
      %p147 = por %p145, %p146
      %p148 = scmp.ne.s32.totalorder %s137, %s140
      %p149 = scmp.eq.s32.totalorder %s22, 1
      %p150 = por %p148, %p149
      %p151 = scmp.ne.s32.totalorder %s140, %s141
      %p152 = scmp.eq.s32.totalorder %s22, 0
      %p153 = por %p151, %p152
      %p154 = scmp.ne.s32.totalorder %s140, %s141
      %p155 = scmp.eq.s32.totalorder %s23, 1
      %p156 = por %p154, %p155
      %p158 = scmp.ne.s32.totalorder %s141, %s157
      %p159 = scmp.eq.s32.totalorder %s23, 0
      %p160 = por %p158, %p159
      %p161 = scmp.le.s32.totalorder 1, %s17
      %p162 = scmp.lt.s32.totalorder %s17, 3
      %p163 = pnand %p161, %p162
      %p164 = pneg %p163
      // Predicated region
      $region9: #{tpu_custom_call.1} parent=5 // pred_check
        _
      $region10: #{tpu_custom_call.1} parent=5 // pred_check_branch
        %166 = sbr.rel (%p163) target = $region12
      $region11: #{tpu_custom_call.1} parent=5 // pred_region
        %s167 = ssub.s32 %s17, 1
        // Predicated region
        $region13: #{tpu_custom_call.1} parent=11 // pred_check
          %p168 = pneg %p78
        $region14: #{tpu_custom_call.1} parent=11 // pred_check_branch
          %170 = sbr.rel (%p168) target = $region16
        $region15: #{tpu_custom_call.1} parent=11 // pred_region
          %s172 = ssub.s32 64, 64
          %173 = vsyncadd [#allocation6], %s172
          %s175 = sshll.u32 [#allocation5], 4
          %s176 = int_to_ptr.vmem [resolvable:$true] %s175
          %178 = dma.hbm_to_vmem [thread:$0]  %s1, 64, %s176, [#allocation6]
        $region16: #{tpu_custom_call.1} parent=11 // pred_fallthru
          _
        // Predicated region
        $region17: #{tpu_custom_call.1} parent=11 // pred_check
          %p179 = pneg %p99
        $region18: #{tpu_custom_call.1} parent=11 // pred_check_branch
          %181 = sbr.rel (%p179) target = $region20
        $region19: #{tpu_custom_call.1} parent=11 // pred_region
          _
        $region20: #{tpu_custom_call.1} parent=11 // pred_fallthru
          _
        // Predicated region
        $region21: #{tpu_custom_call.1} parent=11 // pred_check
          %p182 = pneg %p125
        $region22: #{tpu_custom_call.1} parent=11 // pred_check_branch
          %184 = sbr.rel (%p182) target = $region24
        $region23: #{tpu_custom_call.1} parent=11 // pred_region
          %s185 = smul.u32 2, %s27
          %s187 = ssub.s32 256, 256
          %188 = vsyncadd [#allocation6], %s187
          %s189 = smul.addr %s185, 128
          %s190 = scalar_lea.hbm %s3, %s189
          %s191 = sshll.u32 [#allocation7], 4
          %s192 = int_to_ptr.vmem [resolvable:$true] %s191
          %197 = dma.hbm_to_vmem [thread:$0]  %s190, 256, %s192, [#allocation6], 128, 128, 8
        $region24: #{tpu_custom_call.1} parent=11 // pred_fallthru
          _
      $region12: #{tpu_custom_call.1} parent=5 // pred_fallthru
        _
      %p198 = scmp.lt.s32.totalorder %s17, 2
      // Predicated region
      $region25: #{tpu_custom_call.1} parent=5 // pred_check
        %p199 = pneg %p198
      $region26: #{tpu_custom_call.1} parent=5 // pred_check_branch
        %201 = sbr.rel (%p199) target = $region28
      $region27: #{tpu_custom_call.1} parent=5 // pred_region
        // Predicated region
        $region29: #{tpu_custom_call.1} parent=27 // pred_check
          %p202 = pneg %p51
        $region30: #{tpu_custom_call.1} parent=27 // pred_check_branch
          %204 = sbr.rel (%p202) target = $region32
        $region31: #{tpu_custom_call.1} parent=27 // pred_region
          %s205 = sand.u32 %s41, 1
          %s206 = scalar_lea.sflag [#allocation3], %s205
          %s207 = sand.u32 %s41, 1
          %s208 = smul.addr %s207, 4
          %s209 = scalar_lea.vmem [#allocation2], %s208
          %s211 = ssub.s32 64, 64
          %212 = vsyncadd %s206, %s211
          %s213 = sadd.s32 %s25, %s24
          %s214 = smul.addr %s213, 64
          %s215 = scalar_lea.hbm %s0, %s214
          %s217 = sshll.u32 %s209, 4
          %s218 = int_to_ptr.vmem [resolvable:$true] %s217
          %220 = dma.hbm_to_vmem [thread:$0]  %s215, 64, %s218, %s206
        $region32: #{tpu_custom_call.1} parent=27 // pred_fallthru
          _
      $region28: #{tpu_custom_call.1} parent=5 // pred_fallthru
        _
      %p221 = scmp.le.s32.totalorder 1, %s17
      %p222 = scmp.lt.s32.totalorder %s17, 3
      %p223 = pnand %p221, %p222
      %p224 = pneg %p223
      // Predicated region
      $region33: #{tpu_custom_call.1} parent=5 // pred_check
        _
      $region34: #{tpu_custom_call.1} parent=5 // pred_check_branch
        %226 = sbr.rel (%p223) target = $region36
      $region35: #{tpu_custom_call.1} parent=5 // pred_region
        %s227 = ssub.s32 %s17, 1
        %s228 = sand.u32 %s44, 1
        %s229 = scalar_lea.sflag [#allocation3], %s228
        %s230 = sand.u32 %s44, 1
        %s231 = smul.addr %s230, 4
        %s232 = scalar_lea.vmem [#allocation2], %s231
        // Predicated region
        $region37: #{tpu_custom_call.1} parent=35 // pred_check
          %p233 = pneg %p57
        $region38: #{tpu_custom_call.1} parent=35 // pred_check_branch
          %235 = sbr.rel (%p233) target = $region40
        $region39: #{tpu_custom_call.1} parent=35 // pred_region
          %236 = dma.done %s229, 64
        $region40: #{tpu_custom_call.1} parent=35 // pred_fallthru
          _
        // Predicated region
        $region41: #{tpu_custom_call.1} parent=35 // pred_check
          %p237 = pneg %p78
        $region42: #{tpu_custom_call.1} parent=35 // pred_check_branch
          %239 = sbr.rel (%p237) target = $region44
        $region43: #{tpu_custom_call.1} parent=35 // pred_region
          %240 = dma.done [#allocation6], 64
        $region44: #{tpu_custom_call.1} parent=35 // pred_fallthru
          _
        // Predicated region
        $region45: #{tpu_custom_call.1} parent=35 // pred_check
          %p241 = pneg %p125
        $region46: #{tpu_custom_call.1} parent=35 // pred_check_branch
          %243 = sbr.rel (%p241) target = $region48
        $region47: #{tpu_custom_call.1} parent=35 // pred_region
          %244 = dma.done [#allocation6], 256
        $region48: #{tpu_custom_call.1} parent=35 // pred_fallthru
          _
        %s245 = sand.u32 %s44, 1
        %s246 = scalar_lea.sflag [#allocation3], %s245
        %s247 = sand.u32 %s44, 1
        %s248 = smul.addr %s247, 4
        %s249 = scalar_lea.vmem [#allocation2], %s248
        %p250 = pneg %p57
        %p251 = pneg %p54
        %p252 = pneg %p78
        %p253 = pneg %p75
        %p254 = pneg %p99
        %p255 = pneg %p96
        %p256 = pneg %p125
        %p257 = pneg %p122
        %p258 = pneg %p153
        %p259 = pneg %p150
        %s260 = sand.u32 %s140, 1
        %s261 = scalar_lea.sflag [#allocation4], %s260
        %s262 = sand.u32 %s140, 1
        %s263 = smul.addr %s262, 16
        %s264 = scalar_lea.vmem [#allocation8], %s263
        %s265 = smul.u32 2, %s27
        %s266 = smul.u32 2, %s27
        %v267 = vld [vmem:[%s232] sm:$0xf]
        %v268 = vld [vmem:[#allocation5] sm:$0xf]
        %v269 = vld [vmem:[%s2] sm:$0x1]
        %v271 = vlaneseq
        %v272 = vshrl.u32 %v271, 7
        %v273 = vsub.s32 0, %v272
        %v274 = vrot.slane %v269, %v273
        %276 = vxpose.xlu0.b32.start [1/16] %v267, 128
        %277 = vxpose.xlu0.b32.cont [2/16] 0.0, 128
        %278 = vxpose.xlu0.b32.cont [3/16] 0.0, 128
        %279 = vxpose.xlu0.b32.cont [4/16] 0.0, 128
        %280 = vxpose.xlu0.b32.cont [5/16] 0.0, 128
        %281 = vxpose.xlu0.b32.cont [6/16] 0.0, 128
        %282 = vxpose.xlu0.b32.cont [7/16] 0.0, 128
        %283 = vxpose.xlu0.b32.cont [8/16] 0.0, 128
        %284 = vxpose.xlu0.b32.cont [9/16] 0.0, 128
        %285 = vxpose.xlu0.b32.cont [10/16] 0.0, 128
        %286 = vxpose.xlu0.b32.cont [11/16] 0.0, 128
        %287 = vxpose.xlu0.b32.cont [12/16] 0.0, 128
        %288 = vxpose.xlu0.b32.cont [13/16] 0.0, 128
        %289 = vxpose.xlu0.b32.cont [14/16] 0.0, 128
        %290 = vxpose.xlu0.b32.cont [15/16] 0.0, 128
        %291 = vxpose.xlu0.b32.end [16/16] 0.0, 128
        %v292 = vpop.trf.xlu0
        %v293 = vpop.trf.xlu0
        %v294 = vpop.trf.xlu0
        %v295 = vpop.trf.xlu0
        %v296 = vpop.trf.xlu0
        %v297 = vpop.trf.xlu0
        %v298 = vpop.trf.xlu0
        %v299 = vpop.trf.xlu0
        %v300 = vpop.trf.xlu0
        %v301 = vpop.trf.xlu0
        %v302 = vpop.trf.xlu0
        %v303 = vpop.trf.xlu0
        %v304 = vpop.trf.xlu0
        %v305 = vpop.trf.xlu0
        %v306 = vpop.trf.xlu0
        %v307 = vpop.trf.xlu0
        %vm308 = vcmask 31744
        %v310 = vsel %vm308, %v292, 0
        %v313 = vsel %vm308, %v293, 0
        %vm315 = vcmask 1043456
        %v317 = vsel %vm315, %v268, 0
        %319 = vmatprep.subr.mxu0 0.0
        %320 = vmatpush1.msra.mxu0 %v317
        %321 = vmatprep.subr.mxu0 0.0
        %322 = vmatpush1.msra.mxu0 0.0
        %323 = vmatprep.subr.mxu0 0.0
        %324 = vmatpush1.msra.mxu0 0.0
        %325 = vmatprep.subr.mxu0 0.0
        %326 = vmatpush1.msra.mxu0 0.0
        %327 = vmatprep.subr.mxu0 0.0
        %328 = vmatpush1.msra.mxu0 0.0
        %329 = vmatprep.subr.mxu0 0.0
        %330 = vmatpush1.msra.mxu0 0.0
        %331 = vmatprep.subr.mxu0 0.0
        %332 = vmatpush1.msra.mxu0 0.0
        %333 = vmatprep.subr.mxu0 0.0
        %334 = vmatpush1.msra.mxu0 0.0
        %335 = vmatprep.subr.mxu0 0.0
        %336 = vmatpush1.msra.mxu0 0.0
        %337 = vmatprep.subr.mxu0 0.0
        %338 = vmatpush1.msra.mxu0 0.0
        %339 = vmatprep.subr.mxu0 0.0
        %340 = vmatpush1.msra.mxu0 0.0
        %341 = vmatprep.subr.mxu0 0.0
        %342 = vmatpush1.msra.mxu0 0.0
        %343 = vmatprep.subr.mxu0 0.0
        %344 = vmatpush1.msra.mxu0 0.0
        %345 = vmatprep.subr.mxu0 0.0
        %346 = vmatpush1.msra.mxu0 0.0
        %347 = vmatprep.subr.mxu0 0.0
        %348 = vmatpush1.msra.mxu0 0.0
        %349 = vmatprep.subr.mxu0 0.0
        %350 = vmatpush1.msra.mxu0 0.0
        %351 = vmatprep.subr.mxu0 0.0
        %352 = vmatpush1.msra.mxu0 0.0
        %353 = vmatprep.subr.mxu0 0.0
        %354 = vmatpush1.msra.mxu0 0.0
        %355 = vmatprep.subr.mxu0 0.0
        %356 = vmatpush1.msra.mxu0 0.0
        %357 = vmatprep.subr.mxu0 0.0
        %358 = vmatpush1.msra.mxu0 0.0
        %359 = vmatprep.subr.mxu0 0.0
        %360 = vmatpush1.msra.mxu0 0.0
        %361 = vmatprep.subr.mxu0 0.0
        %362 = vmatpush1.msra.mxu0 0.0
        %363 = vmatprep.subr.mxu0 0.0
        %364 = vmatpush1.msra.mxu0 0.0
        %365 = vmatprep.subr.mxu0 0.0
        %366 = vmatpush1.msra.mxu0 0.0
        %367 = vmatprep.subr.mxu0 0.0
        %368 = vmatpush1.msra.mxu0 0.0
        %369 = vmatprep.subr.mxu0 0.0
        %370 = vmatpush1.msra.mxu0 0.0
        %371 = vmatprep.subr.mxu0 0.0
        %372 = vmatpush1.msra.mxu0 0.0
        %373 = vmatprep.subr.mxu0 0.0
        %374 = vmatpush1.msra.mxu0 0.0
        %375 = vmatprep.subr.mxu0 0.0
        %376 = vmatpush1.msra.mxu0 0.0
        %377 = vmatprep.subr.mxu0 0.0
        %378 = vmatpush1.msra.mxu0 0.0
        %379 = vmatprep.subr.mxu0 0.0
        %380 = vmatpush1.msra.mxu0 0.0
        %381 = vmatprep.subr.mxu0 0.0
        %382 = vmatpush1.msra.mxu0 0.0
        %383 = vmatprep.mubr.f32.mxu0 0.0
        %384 = vmatmul.mubr.f32.gmra.mrb[0].mxu0 %v310
        %v385 = vpop.f32.mrb[0].mxu0
        %v386 = vadd.f32 %v274, %v385
        %v387 = vpop.f32.mrb[0].mxu0
        %388 = vmatprep.mubr.f32.mxu0 0.0
        %389 = vmatmul.mubr.f32.gmra.mrb[0].mxu0 %v313
        %v390 = vpop.f32.mrb[0].mxu0
        %v391 = vadd.f32 %v274, %v390
        %v392 = vpop.f32.mrb[0].mxu0
        %393 = vdwg.mxu0
        %v394 = vld [vmem:[#allocation7] sm:$0xff]
        %v395 = vld [vmem:[#allocation7 + $0x8] sm:$0xff]
        %v396 = vadd.f32 %v386, %v394
        %v397 = vadd.f32 %v391, %v395
        %vm398 = vcmask 261120
        %399 = vst.msk [vmem:[%s264] sm:$0xff] %vm398, %v396
        %400 = vst.msk [vmem:[%s264 + $0x8] sm:$0xff] %vm398, %v397
        %s401 = sand.u32 %s140, 1
        %s402 = scalar_lea.sflag [#allocation4], %s401
        %s403 = sand.u32 %s140, 1
        %s404 = smul.addr %s403, 16
        %s405 = scalar_lea.vmem [#allocation8], %s404
        // Predicated region
        $region49: #{tpu_custom_call.1} parent=35 // pred_check
          %p406 = pneg %p150
        $region50: #{tpu_custom_call.1} parent=35 // pred_check_branch
          %408 = sbr.rel (%p406) target = $region52
        $region51: #{tpu_custom_call.1} parent=35 // pred_region
          %s409 = smul.u32 2, %s27
          %s411 = ssub.s32 256, 256
          %412 = vsyncadd %s402, %s411
          %s413 = smul.addr %s26, 2
          %s414 = sadd.s32 %s409, %s413
          %s415 = smul.addr %s414, 128
          %s416 = scalar_lea.hbm %s4, %s415
          %s417 = sshll.u32 %s405, 4
          %s418 = int_to_ptr.vmem [resolvable:$true] %s417
          %423 = dma.vmem_to_hbm [thread:$0]  %s418, 256, %s416, %s402, 128, 128, 8
        $region52: #{tpu_custom_call.1} parent=35 // pred_fallthru
          _
      $region36: #{tpu_custom_call.1} parent=5 // pred_fallthru
        _
      %p424 = scmp.le.s32.totalorder 2, %s17
      // Predicated region
      $region53: #{tpu_custom_call.1} parent=5 // pred_check
        %p425 = pneg %p424
      $region54: #{tpu_custom_call.1} parent=5 // pred_check_branch
        %427 = sbr.rel (%p425) target = $region56
      $region55: #{tpu_custom_call.1} parent=5 // pred_region
        %s428 = ssub.s32 %s17, 2
        // Predicated region
        $region57: #{tpu_custom_call.1} parent=55 // pred_check
          %p429 = pneg %p156
        $region58: #{tpu_custom_call.1} parent=55 // pred_check_branch
          %431 = sbr.rel (%p429) target = $region60
        $region59: #{tpu_custom_call.1} parent=55 // pred_region
          %s432 = sand.u32 %s141, 1
          %s433 = scalar_lea.sflag [#allocation4], %s432
          %s434 = sand.u32 %s141, 1
          %s435 = smul.addr %s434, 16
          %s436 = scalar_lea.vmem [#allocation8], %s435
          %437 = dma.done %s433, 256
        $region60: #{tpu_custom_call.1} parent=55 // pred_fallthru
          _
      $region56: #{tpu_custom_call.1} parent=5 // pred_fallthru
        _
    $region6: #{tpu_custom_call.1} parent=1 // loop_footer
      %s21 = sadd.s32 1, %s17
    $region7: #{tpu_custom_call.1} parent=1 // loop_footer_branch
      %16 = sbr.rel target = $region3
    $region8: #{tpu_custom_call.1} parent=1 // loop_exit
      _
    %438 = vsyncpa [#allocation3], 1
    %s439 = scalar_lea.sflag [#allocation3], 1
    %440 = vsyncpa %s439, 1
    %441 = vsyncpa [#allocation6], 1
    %442 = vsyncpa [#allocation4], 1
    %s443 = scalar_lea.sflag [#allocation4], 1
    %444 = vsyncpa %s443, 1

</llo_original>
